<compile_context>
chip_gen: v5e
topology: v5e:2x2
jax: 0.10.0
libtpu: 0.0.40
codegen_flags: <defaults>
</compile_context>

<pallas_src>
import functools
import math

import jax
import jax.numpy as jnp
from jax.experimental import pallas as pl
from jax.experimental.pallas import tpu as pltpu


# --------------------------------------------------------------------------
# Linear: y = x @ w + b
# --------------------------------------------------------------------------
def _linear_resident_kernel(x_ref, w_ref, b_ref, o_ref):
    # Whole weight + bias resident in VMEM; x / out stream once over M tiles.
    acc = jnp.dot(x_ref[...], w_ref[...], preferred_element_type=jnp.float32)
    o_ref[...] = (acc + b_ref[...].astype(jnp.float32)).astype(o_ref.dtype)


def _linear_ktiled_kernel(x_ref, w_ref, b_ref, o_ref, acc_ref, *, k_total):
    k = pl.program_id(2)

    @pl.when(k == 0)
    def _():
        acc_ref[...] = jnp.zeros_like(acc_ref)

    x = x_ref[...]
    if k_total is not None:
        # K does not divide the tile: zero the garbage K tail of the block
        # (zeroed x columns annihilate the matching garbage w rows).
        tk = x.shape[1]
        col = jax.lax.broadcasted_iota(jnp.int32, x.shape, 1) + k * tk
        x = jnp.where(col < k_total, x, jnp.zeros_like(x))
    acc_ref[...] += jnp.dot(x, w_ref[...], preferred_element_type=jnp.float32)

    @pl.when(k == pl.num_programs(2) - 1)
    def _():
        o_ref[...] = (acc_ref[...] + b_ref[...].astype(jnp.float32)).astype(
            o_ref.dtype
        )


def linear(x, w, b, *, tm=256, tn=256, tk=512):
    """x: (M, K), w: (K, N), b: (N,) -> x @ w + b of shape (M, N)."""
    M, K = x.shape
    Kw, N = w.shape
    assert K == Kw and b.shape == (N,)
    es = x.dtype.itemsize
    tm = min(M, tm)
    b2 = b.reshape(1, N)

    # Resident path (SAM-sized projections, K = N ~ 256): whole (K, N) weight
    # lives in VMEM, no reduction grid axis, no accumulator scratch.
    if K * N * es <= 8 * 1024 * 1024 and K <= 4096 and N <= 2048:
        cost = pl.CostEstimate(
            flops=2 * M * N * K,
            transcendentals=0,
            bytes_accessed=es * (M * K + K * N + M * N + N),
        )
        return pl.pallas_call(
            _linear_resident_kernel,
            out_shape=jax.ShapeDtypeStruct((M, N), x.dtype),
            grid_spec=pltpu.PrefetchScalarGridSpec(
                num_scalar_prefetch=0,
                grid=(pl.cdiv(M, tm),),
                in_specs=[
                    pl.BlockSpec((tm, K), lambda i: (i, 0)),
                    pl.BlockSpec((K, N), lambda i: (0, 0)),
                    pl.BlockSpec((1, N), lambda i: (0, 0)),
                ],
                out_specs=pl.BlockSpec((tm, N), lambda i: (i, 0)),
            ),
            compiler_params=pltpu.CompilerParams(
                dimension_semantics=("parallel",)
            ),
            cost_estimate=cost,
        )(x, w, b2)

    # General path: (M, N, K)-tiled with an f32 VMEM accumulator; arbitrary K
    # is supported via in-kernel masking of the trailing K block.
    tn = min(N, tn)
    tk = min(K, tk)
    mask_tail = (K % tk) != 0
    kern = functools.partial(
        _linear_ktiled_kernel, k_total=K if mask_tail else None
    )
    cost = pl.CostEstimate(
        flops=2 * M * N * K,
        transcendentals=0,
        bytes_accessed=es
        * (M * K * pl.cdiv(N, tn) + K * N * pl.cdiv(M, tm) + M * N + N),
    )
    return pl.pallas_call(
        kern,
        out_shape=jax.ShapeDtypeStruct((M, N), x.dtype),
        grid_spec=pltpu.PrefetchScalarGridSpec(
            num_scalar_prefetch=0,
            grid=(pl.cdiv(M, tm), pl.cdiv(N, tn), pl.cdiv(K, tk)),
            in_specs=[
                pl.BlockSpec((tm, tk), lambda i, j, k: (i, k)),
                pl.BlockSpec((tk, tn), lambda i, j, k: (k, j)),
                pl.BlockSpec((1, tn), lambda i, j, k: (0, j)),
            ],
            out_specs=pl.BlockSpec((tm, tn), lambda i, j, k: (i, j)),
            scratch_shapes=[pltpu.VMEM((tm, tn), jnp.float32)],
        ),
        compiler_params=pltpu.CompilerParams(
            dimension_semantics=("parallel", "parallel", "arbitrary")
        ),
        cost_estimate=cost,
    )(x, w, b2)


# --------------------------------------------------------------------------
# Multi-head attention core: per head softmax(q k^T) v  (scale pre-folded)
# --------------------------------------------------------------------------
def _attention_kernel(q_ref, k_ref, v_ref, o_ref, *, num_heads, ch):
    # q: (tq, H*ch) -- 1/sqrt(ch) already folded into the q projection.
    # k/v: (Nk, H*ch) -- resident in VMEM across every q tile of this batch row.
    q = q_ref[0]
    k = k_ref[0]
    v = v_ref[0]

    outs = []
    for h in range(num_heads):  # static unroll; heads are few
        sl = slice(h * ch, (h + 1) * ch)
        qh, kh, vh = q[:, sl], k[:, sl], v[:, sl]
        # QK^T on the MXU in the input dtype, f32 accumulation.
        s = jax.lax.dot_general(
            qh,
            kh,
            (((1,), (1,)), ((), ())),
            preferred_element_type=jnp.float32,
        )  # (tq, Nk) f32
        m = jnp.max(s, axis=-1, keepdims=True)
        p = jnp.exp(s - m)
        l = jnp.sum(p, axis=-1, keepdims=True)
        o_h = jnp.dot(
            p.astype(vh.dtype), vh, preferred_element_type=jnp.float32
        )
        outs.append(o_h * pl.reciprocal(l, approx=True))
    # Lane-dense (tq, H*ch) output block -> single dense HBM writeback.
    o_ref[0] = jnp.concatenate(outs, axis=-1).astype(o_ref.dtype)


def multihead_attention(q, k, v, *, num_heads, tq=256):
    """q: (B, Nq, D), k/v: (B, Nk, D), D = num_heads*ch -> (B, Nq, D)."""
    B, Nq, D = q.shape
    _, Nk, _ = k.shape
    assert D % num_heads == 0
    ch = D // num_heads
    tq = min(Nq, tq)
    es = q.dtype.itemsize

    # TODO(synk): for very long Nk (K/V no longer fitting VMEM per batch row)
    # add a kv grid axis with an online-softmax accumulator; at SAM-decoder
    # sizes the fully-resident K/V path below is simpler and faster.
    cost = pl.CostEstimate(
        flops=4 * B * Nq * Nk * D,
        transcendentals=B * num_heads * Nq * Nk,
        bytes_accessed=es * B * (2 * Nq * D + 2 * Nk * D),
    )
    kern = functools.partial(_attention_kernel, num_heads=num_heads, ch=ch)
    return pl.pallas_call(
        kern,
        out_shape=jax.ShapeDtypeStruct((B, Nq, D), q.dtype),
        grid_spec=pltpu.PrefetchScalarGridSpec(
            num_scalar_prefetch=0,
            grid=(B, pl.cdiv(Nq, tq)),
            in_specs=[
                pl.BlockSpec((1, tq, D), lambda b, qi: (b, qi, 0)),
                # K/V index maps ignore the q-tile axis -> DMA'd once per batch
                # row and kept resident across all q tiles.
                pl.BlockSpec((1, Nk, D), lambda b, qi: (b, 0, 0)),
                pl.BlockSpec((1, Nk, D), lambda b, qi: (b, 0, 0)),
            ],
            out_specs=pl.BlockSpec((1, tq, D), lambda b, qi: (b, qi, 0)),
        ),
        compiler_params=pltpu.CompilerParams(
            # Both axes independent: feeds both v7x TensorCores when B >= 2,
            # or via the q-tile axis when B == 1.
            dimension_semantics=("parallel", "parallel"),
        ),
        cost_estimate=cost,
    )(q, k, v)


# --------------------------------------------------------------------------
# Full Attention forward (matches the PyTorch module semantics)
# --------------------------------------------------------------------------
def attention_forward(q, k, v, params, num_heads):
    B, Nq, E = q.shape
    _, Nk, _ = k.shape
    D = params["wq"].shape[1]  # internal_dim
    assert D % num_heads == 0
    ch = D // num_heads
    scale = 1.0 / math.sqrt(ch)

    # Fold the 1/sqrt(ch) softmax scale into the q projection (free; removes
    # per-step VPU scaling from the attention kernel).
    wq = params["wq"] * jnp.asarray(scale, params["wq"].dtype)
    bq = params["bq"] * jnp.asarray(scale, params["bq"].dtype)

    qp = linear(q.reshape(B * Nq, E), wq, bq).reshape(B, Nq, D)
    kp = linear(k.reshape(B * Nk, E), params["wk"], params["bk"]).reshape(B, Nk, D)
    vp = linear(v.reshape(B * Nk, E), params["wv"], params["bv"]).reshape(B, Nk, D)

    # Heads are selected inside the attention kernel (column slices of the
    # (.., D) projections): no (B, H, N, ch) transposes / extra HBM relayout
    # passes, and the attention output is already the contiguous (B*Nq, D)
    # input of the output projection.
    oh = multihead_attention(qp, kp, vp, num_heads=num_heads)

    out = linear(oh.reshape(B * Nq, D), params["wo"], params["bo"])
    return out.reshape(B, Nq, E)


# --------------------------------------------------------------------------
# Demo / correctness check
# --------------------------------------------------------------------------
if __name__ == "__main__":
    batch, n_tokens, embedding_dim, num_heads = 2, 16, 32, 4
    downsample_rate = 1
    internal_dim = embedding_dim // downsample_rate
    c_per_head = internal_dim // num_heads

    keys = jax.random.split(jax.random.PRNGKey(0), 11)
    q = jax.random.normal(keys[0], (batch, n_tokens, embedding_dim), jnp.float32)
    k = jax.random.normal(keys[1], (batch, n_tokens, embedding_dim), jnp.float32)
    v = jax.random.normal(keys[2], (batch, n_tokens, embedding_dim), jnp.float32)

    def init_linear(kw, kb, fan_in, fan_out):
        bound = 1.0 / math.sqrt(fan_in)
        w = jax.random.uniform(kw, (fan_in, fan_out), jnp.float32, -bound, bound)
        b = jax.random.uniform(kb, (fan_out,), jnp.float32, -bound, bound)
        return w, b

    wq, bq = init_linear(keys[3], keys[4], embedding_dim, internal_dim)
    wk, bk = init_linear(keys[5], keys[6], embedding_dim, internal_dim)
    wv, bv = init_linear(keys[7], keys[8], embedding_dim, internal_dim)
    wo, bo = init_linear(keys[9], keys[10], internal_dim, embedding_dim)

    params = dict(wq=wq, bq=bq, wk=wk, bk=bk, wv=wv, bv=bv, wo=wo, bo=bo)

    out = attention_forward(q, k, v, params, num_heads)
    out = jax.block_until_ready(out)

    # Plain-JAX reference (same math as the PyTorch module).
    hp = jax.lax.Precision.HIGHEST

    def split(x):
        b, n, _ = x.shape
        return x.reshape(b, n, num_heads, c_per_head).transpose(0, 2, 1, 3)

    qp = jnp.matmul(q, wq, precision=hp) + bq
    kp = jnp.matmul(k, wk, precision=hp) + bk
    vp = jnp.matmul(v, wv, precision=hp) + bv
    qh, kh, vh = split(qp), split(kp), split(vp)
    attn = jnp.einsum("bhqc,bhkc->bhqk", qh, kh, precision=hp) / math.sqrt(
        c_per_head
    )
    attn = jax.nn.softmax(attn, axis=-1)
    oh = jnp.einsum("bhqk,bhkc->bhqc", attn, vh, precision=hp)
    o_ref = oh.transpose(0, 2, 1, 3).reshape(batch, n_tokens, internal_dim)
    ref = jnp.matmul(o_ref, wo, precision=hp) + bo

    assert out.shape == ref.shape
    assert jnp.allclose(out, ref, atol=1e-2, rtol=1e-2), float(
        jnp.max(jnp.abs(out - ref))
    )
    print("KERNEL_OK")
</pallas_src>

<mosaic_0001>
module attributes {stable_mosaic.version = 11 : i64} {
  func.func @_linear_resident_kernel(%arg0: i32, %arg1: memref<32x32xf32, #tpu.memory_space<vmem>>, %arg2: memref<32x32xf32, #tpu.memory_space<vmem>>, %arg3: memref<1x32xf32, #tpu.memory_space<vmem>>, %arg4: memref<32x32xf32, #tpu.memory_space<vmem>>) attributes {dimension_semantics = [#tpu.dimension_semantics<parallel>], iteration_bounds = array<i64: 1>, scalar_prefetch = 0 : i64, scratch_operands = 0 : i64, tpu.core_type = #tpu.core_type<tc>, window_params = [{transform_indices = @transform_0, window_bounds = array<i64: 32, 32>}, {pipeline_mode = #tpu.pipeline_mode<synchronous>, transform_indices = @transform_1, window_bounds = array<i64: 32, 32>}, {pipeline_mode = #tpu.pipeline_mode<synchronous>, transform_indices = @transform_2, window_bounds = array<i64: 1, 32>}, {transform_indices = @transform_3, window_bounds = array<i64: 32, 32>}]} {
    %c0 = arith.constant 0 : index
    %c0_0 = arith.constant 0 : index
    %0 = vector.load %arg1[%c0, %c0_0] : memref<32x32xf32, #tpu.memory_space<vmem>>, vector<32x32xf32>
    %c0_1 = arith.constant 0 : index
    %c0_2 = arith.constant 0 : index
    %1 = vector.load %arg2[%c0_1, %c0_2] : memref<32x32xf32, #tpu.memory_space<vmem>>, vector<32x32xf32>
    %cst = arith.constant dense<0.000000e+00> : vector<32x32xf32>
    %2 = tpu.matmul %0, %1, %cst {dimension_numbers = #tpu.dot_dimension_numbers<[1], [0], [0], [1], [0, 0, 1, 1], [], []>} : vector<32x32xf32>, vector<32x32xf32>, vector<32x32xf32> -> vector<32x32xf32>
    %c0_3 = arith.constant 0 : index
    %c0_4 = arith.constant 0 : index
    %3 = vector.load %arg3[%c0_3, %c0_4] : memref<1x32xf32, #tpu.memory_space<vmem>>, vector<1x32xf32>
    %4 = vector.broadcast %3 : vector<1x32xf32> to vector<32x32xf32>
    %5 = arith.addf %2, %4 : vector<32x32xf32>
    %c0_5 = arith.constant 0 : index
    %c0_6 = arith.constant 0 : index
    %6 = vector.load %arg4[%c0_5, %c0_6] : memref<32x32xf32, #tpu.memory_space<vmem>>, vector<32x32xf32>
    tpu.vector_store %arg4[%c0_5, %c0_6], %5 {strides = array<i32>} : memref<32x32xf32, #tpu.memory_space<vmem>>, vector<32x32xf32>,
    return
  }
  func.func @transform_0(%arg0: i32) -> (i32, i32) {
    %c0_i32 = arith.constant 0 : i32
    %c0_i32_0 = arith.constant 0 : i32
    return %arg0, %c0_i32 : i32, i32
  }
  func.func @transform_1(%arg0: i32) -> (i32, i32) {
    %c0_i32 = arith.constant 0 : i32
    %c0_i32_0 = arith.constant 0 : i32
    %c0_i32_1 = arith.constant 0 : i32
    return %c0_i32, %c0_i32_0 : i32, i32
  }
  func.func @transform_2(%arg0: i32) -> (i32, i32) {
    %c0_i32 = arith.constant 0 : i32
    %c0_i32_0 = arith.constant 0 : i32
    %c0_i32_1 = arith.constant 0 : i32
    return %c0_i32, %c0_i32_0 : i32, i32
  }
  func.func @transform_3(%arg0: i32) -> (i32, i32) {
    %c0_i32 = arith.constant 0 : i32
    %c0_i32_0 = arith.constant 0 : i32
    return %arg0, %c0_i32 : i32, i32
  }
}

</mosaic_0001>

<llo_original>
// kernel: tpu_custom_call.1
$region0: #{tpu_custom_call.1}
  #allocation0 [shape = 'u32[]', space=smem, size = 0x4, offset = 0x4, fixed_abs, tag = 'smem constant byte address 0x4 - core index']
  #allocation1 [shape = 'u32[72,128]{1,0:T(1,128)}', space=vmem, size = 0x9000, scoped, tag = 'internal scratch']
  %s0 = inlined_call_operand.hbm [shape: f32[32,32], index: 0, kind: input, shape index: {}]
  %s1 = inlined_call_operand.hbm [shape: f32[32,32], index: 1, kind: input, shape index: {}]
  %s2 = inlined_call_operand.vmem [shape: f32[1,32], index: 2, kind: input, shape index: {}]
  %s3 = inlined_call_operand.hbm [shape: f32[32,32], index: 3, kind: output, shape index: {}]
  %s4 = sld [smem:[#allocation0]]
  $region30: #{tpu_custom_call.1} parent=0
    _
  %s6 = ssub.s32 1, %s4
  %s7 = scalar_select 0, %s6, %s4
  $region1: #{tpu_custom_call.1} parent=0
    #allocation2 [shape = 'u8[16384]{0}', space=vmem, size = 0x4000, scoped, tag = 'input window, operand 0, single buffered']
    #allocation3 [shape = 's32[1]{0}', space=sflag, size = 0x4, scoped, tag = 'scoped memory for tpu_custom_call.1']
    #allocation4 [shape = 's32[1]{0}', space=sflag, size = 0x4, scoped, tag = 'scoped memory for tpu_custom_call.1']
    #allocation5 [shape = 'u8[16384]{0}', space=vmem, size = 0x4000, scoped, tag = 'input window, operand 1, single buffered']
    #allocation6 [shape = 's32[1]{0}', space=sflag, size = 0x4, scoped, tag = 'scoped memory for tpu_custom_call.1']
    #allocation7 [shape = 'u8[16384]{0}', space=vmem, size = 0x4000, scoped, tag = 'output window, operand 0, single buffered']
    %8 = vsyncpa [#allocation3], 0
    %9 = vsyncpa [#allocation6], 0
    %10 = vsyncpa [#allocation4], 0
    // Predicated region
    $region2: #{tpu_custom_call.1} parent=1 // pred_check
      _
    $region3: #{tpu_custom_call.1} parent=1 // pred_check_branch
      %12 = sbr.rel (0) target = $region5
    $region4: #{tpu_custom_call.1} parent=1 // pred_region
      %14 = vsyncadd [#allocation3], 0
      %s15 = sshll.u32 %s0, 4
      %s16 = int_to_ptr.hbm [resolvable:$true] %s15
      %s17 = sshll.u32 [#allocation2], 4
      %s18 = int_to_ptr.vmem [resolvable:$true] %s17
      %23 = dma.hbm_to_vmem [thread:$0]  %s16, 512, %s18, [#allocation3], 128, 128, 8
    $region5: #{tpu_custom_call.1} parent=1 // pred_fallthru
      _
    // Predicated region
    $region6: #{tpu_custom_call.1} parent=1 // pred_check
      _
    $region7: #{tpu_custom_call.1} parent=1 // pred_check_branch
      %25 = sbr.rel (0) target = $region9
    $region8: #{tpu_custom_call.1} parent=1 // pred_region
      %27 = vsyncadd [#allocation6], 0
      %s28 = sshll.u32 %s1, 4
      %s29 = int_to_ptr.hbm [resolvable:$true] %s28
      %s30 = sshll.u32 [#allocation5], 4
      %s31 = int_to_ptr.vmem [resolvable:$true] %s30
      %36 = dma.hbm_to_vmem [thread:$0]  %s29, 512, %s31, [#allocation6], 128, 128, 8
    $region9: #{tpu_custom_call.1} parent=1 // pred_fallthru
      _
    // Predicated region
    $region10: #{tpu_custom_call.1} parent=1 // pred_check
      _
    $region11: #{tpu_custom_call.1} parent=1 // pred_check_branch
      %38 = sbr.rel (0) target = $region13
    $region12: #{tpu_custom_call.1} parent=1 // pred_region
      _
    $region13: #{tpu_custom_call.1} parent=1 // pred_fallthru
      _
    // Predicated region
    $region14: #{tpu_custom_call.1} parent=1 // pred_check
      _
    $region15: #{tpu_custom_call.1} parent=1 // pred_check_branch
      %40 = sbr.rel (0) target = $region17
    $region16: #{tpu_custom_call.1} parent=1 // pred_region
      %42 = dma.done [#allocation3], 512
    $region17: #{tpu_custom_call.1} parent=1 // pred_fallthru
      _
    // Predicated region
    $region18: #{tpu_custom_call.1} parent=1 // pred_check
      _
    $region19: #{tpu_custom_call.1} parent=1 // pred_check_branch
      %44 = sbr.rel (0) target = $region21
    $region20: #{tpu_custom_call.1} parent=1 // pred_region
      %46 = dma.done [#allocation6], 512
    $region21: #{tpu_custom_call.1} parent=1 // pred_fallthru
      _
    %v47 = vld [vmem:[#allocation2] sm:$0xff]
    %v48 = vld [vmem:[#allocation2 + $0x8] sm:$0xff]
    %v49 = vld [vmem:[#allocation2 + $0x10] sm:$0xff]
    %v50 = vld [vmem:[#allocation2 + $0x18] sm:$0xff]
    %v51 = vld [vmem:[#allocation5] sm:$0xff]
    %v52 = vld [vmem:[#allocation5 + $0x8] sm:$0xff]
    %v53 = vld [vmem:[#allocation5 + $0x10] sm:$0xff]
    %v54 = vld [vmem:[#allocation5 + $0x18] sm:$0xff]
    %v55 = vld [vmem:[%s2] sm:$0x1]
    %v57 = vperm.slane %v55, 0
    %vm59 = vcmask 261120
    %v61 = vsel %vm59, %v47, 0
    %v64 = vsel %vm59, %v48, 0
    %v67 = vsel %vm59, %v49, 0
    %v70 = vsel %vm59, %v50, 0
    %72 = vmatpush.msra.mxu0 0.0
    %73 = vmatpush.msra.mxu0 0.0
    %74 = vmatpush.msra.mxu0 0.0
    %75 = vmatpush.msra.mxu0 0.0
    %76 = vmatpush.msra.mxu0 0.0
    %77 = vmatpush.msra.mxu0 0.0
    %78 = vmatpush.msra.mxu0 0.0
    %79 = vmatpush.msra.mxu0 0.0
    %80 = vmatpush.msra.mxu0 0.0
    %81 = vmatpush.msra.mxu0 0.0
    %82 = vmatpush.msra.mxu0 0.0
    %83 = vmatpush.msra.mxu0 0.0
    %84 = vmatpush.msra.mxu0 %v54
    %85 = vmatpush.msra.mxu0 %v53
    %86 = vmatpush.msra.mxu0 %v52
    %87 = vmatpush.msra.mxu0 %v51
    %88 = vmatmul.f32.gmra.mxu0 %v61
    %v89 = vpop.f32.mrf.mxu0
    %v90 = vadd.f32 %v57, %v89
    %91 = vmatmul.f32.gmra.mxu0 %v64
    %v92 = vpop.f32.mrf.mxu0
    %v93 = vadd.f32 %v57, %v92
    %94 = vmatmul.f32.gmra.mxu0 %v67
    %v95 = vpop.f32.mrf.mxu0
    %v96 = vadd.f32 %v57, %v95
    %97 = vmatmul.f32.gmra.mxu0 %v70
    %v98 = vpop.f32.mrf.mxu0
    %v99 = vadd.f32 %v57, %v98
    %100 = vdwg.mxu0
    %101 = vst.msk [vmem:[#allocation7] sm:$0xff] %vm59, %v90
    %102 = vst.msk [vmem:[#allocation7 + $0x8] sm:$0xff] %vm59, %v93
    %103 = vst.msk [vmem:[#allocation7 + $0x10] sm:$0xff] %vm59, %v96
    %104 = vst.msk [vmem:[#allocation7 + $0x18] sm:$0xff] %vm59, %v99
    // Predicated region
    $region22: #{tpu_custom_call.1} parent=1 // pred_check
      _
    $region23: #{tpu_custom_call.1} parent=1 // pred_check_branch
      %106 = sbr.rel (0) target = $region25
    $region24: #{tpu_custom_call.1} parent=1 // pred_region
      %108 = vsyncadd [#allocation4], 0
      %s109 = sshll.u32 [#allocation7], 4
      %s110 = int_to_ptr.vmem [resolvable:$true] %s109
      %s111 = sshll.u32 %s3, 4
      %s112 = int_to_ptr.hbm [resolvable:$true] %s111
      %117 = dma.vmem_to_hbm [thread:$0]  %s110, 512, %s112, [#allocation4], 128, 128, 8
    $region25: #{tpu_custom_call.1} parent=1 // pred_fallthru
      _
    // Predicated region
    $region26: #{tpu_custom_call.1} parent=1 // pred_check
      _
    $region27: #{tpu_custom_call.1} parent=1 // pred_check_branch
      %119 = sbr.rel (0) target = $region29
    $region28: #{tpu_custom_call.1} parent=1 // pred_region
      %121 = dma.done [#allocation4], 512
    $region29: #{tpu_custom_call.1} parent=1 // pred_fallthru
      _
    %122 = vsyncpa [#allocation3], 1
    %123 = vsyncpa [#allocation6], 1
    %124 = vsyncpa [#allocation4], 1

</llo_original>
